<compile_context>
chip_gen: v5e
topology: v5e:2x2
jax: 0.10.0
libtpu: 0.0.40
codegen_flags: <defaults>
</compile_context>

<pallas_src>
import jax
import jax.numpy as jnp
import numpy as np
from jax.experimental import pallas as pl
from jax.experimental.pallas import tpu as pltpu

C = 64                     # channel count fixed by the module definition
EPS = 1e-5
MXU_DTYPE = jnp.bfloat16   # matmul operand dtype (accumulation stays f32)


def resblock_kernel(x_ref, w1_ref, sh1_ref, w2_ref, sh2_ref, o_ref, xpad_ref):
    # x_ref: (1, C, L) f32 block (one batch element); C on sublanes, L on lanes.
    x = x_ref[0]                                       # (C, L) f32
    L = x.shape[1]

    # Stage a zero-padded copy of the tile in VMEM scratch: xpad[:, j] = x[:, j-1],
    # with zero halo columns at j = 0 and j = L + 1.  (Every column is rewritten each
    # grid step, so the scratch carries no state across the parallel grid axis.)
    xpad_ref[:, pl.ds(0, 1)] = jnp.zeros((C, 1), jnp.float32)
    xpad_ref[:, pl.ds(L + 1, 1)] = jnp.zeros((C, 1), jnp.float32)
    xpad_ref[:, pl.ds(1, L)] = x

    # im2col for the k=3 conv: rows [0:C) = x[:, l-1], [C:2C) = x[:, l], [2C:3C) = x[:, l+1]
    xcat = jnp.concatenate(
        [xpad_ref[:, pl.ds(0, L)],
         xpad_ref[:, pl.ds(1, L)],
         xpad_ref[:, pl.ds(2, L)]],
        axis=0).astype(MXU_DTYPE)                      # (3C, L) bf16

    # conv1 (k=3, pad=1) + bias + BN1 folded into w1 / sh1: one K=192 MXU matmul.
    h = jnp.dot(w1_ref[...], xcat, preferred_element_type=jnp.float32)   # (C, L) f32
    h = jnp.maximum(h + sh1_ref[...], 0.0)             # shift + ReLU (f32 epilogue)

    # conv2 (k=1) + bias + BN2 folded into w2 / sh2.
    h = jnp.dot(w2_ref[...], h.astype(MXU_DTYPE),
                preferred_element_type=jnp.float32)    # (C, L) f32
    h = jnp.maximum(h + sh2_ref[...], 0.0)

    o_ref[0] = (h + x).astype(o_ref.dtype)             # residual add in f32


def resblock_forward(x_ncl, kernel_params):
    """x_ncl: (N, C=64, L) float32 — same layout as the PyTorch module input."""
    N, Cc, L = x_ncl.shape
    assert Cc == C
    w1, sh1, w2, sh2 = kernel_params

    const = lambda shape: pl.BlockSpec(shape, lambda n: tuple(0 for _ in shape))
    return pl.pallas_call(
        resblock_kernel,
        out_shape=jax.ShapeDtypeStruct((N, C, L), jnp.float32),
        grid=(N,),
        in_specs=[
            pl.BlockSpec((1, C, L), lambda n: (n, 0, 0)),   # x, one batch element / step
            const((C, 3 * C)),                              # folded conv1 weight (bf16)
            const((C, 1)),                                  # folded conv1 shift  (f32)
            const((C, C)),                                  # folded conv2 weight (bf16)
            const((C, 1)),                                  # folded conv2 shift  (f32)
        ],
        out_specs=pl.BlockSpec((1, C, L), lambda n: (n, 0, 0)),
        scratch_shapes=[pltpu.VMEM((C, L + 2), jnp.float32)],
        compiler_params=pltpu.CompilerParams(
            dimension_semantics=("parallel",),
            vmem_limit_bytes=64 * 1024 * 1024),
    )(x_ncl, w1, sh1, w2, sh2)


def make_params(key):
    """Synthetic PyTorch-style parameters + folded kernel-layout parameters.

    Conv weights are rounded to bf16-representable values and the BN scale is an exact
    power of two, so the bf16-operand kernel and the f32 module reference see identical
    effective operands and can be compared with tight tolerances.
    """
    ks = jax.random.split(key, 12)
    as_bf16_exact = lambda a: a.astype(jnp.bfloat16).astype(jnp.float32)

    bound1 = 1.0 / np.sqrt(C * 3)
    w1 = as_bf16_exact(jax.random.uniform(ks[0], (C, C, 3), jnp.float32, -bound1, bound1))
    b1 = jax.random.uniform(ks[1], (C,), jnp.float32, -bound1, bound1)
    bound2 = 1.0 / np.sqrt(C * 1)
    w2 = as_bf16_exact(jax.random.uniform(ks[2], (C, C, 1), jnp.float32, -bound2, bound2))
    b2 = jax.random.uniform(ks[3], (C,), jnp.float32, -bound2, bound2)

    pow2 = jnp.array([0.5, 1.0, 2.0], jnp.float32)
    v1 = jax.random.uniform(ks[4], (C,), jnp.float32, 0.5, 1.5)
    s1 = pow2[jax.random.randint(ks[5], (C,), 0, 3)]
    g1 = s1 * jnp.sqrt(v1 + EPS)          # => g1 / sqrt(v1 + eps) == s1 exactly
    be1 = jax.random.uniform(ks[6], (C,), jnp.float32, -0.5, 0.5)
    m1 = jax.random.uniform(ks[7], (C,), jnp.float32, -0.5, 0.5)

    v2 = jax.random.uniform(ks[8], (C,), jnp.float32, 0.5, 1.5)
    s2 = pow2[jax.random.randint(ks[9], (C,), 0, 3)]
    g2 = s2 * jnp.sqrt(v2 + EPS)
    be2 = jax.random.uniform(ks[10], (C,), jnp.float32, -0.5, 0.5)
    m2 = jax.random.uniform(ks[11], (C,), jnp.float32, -0.5, 0.5)

    module_params = (w1, b1, g1, be1, m1, v1, w2, b2, g2, be2, m2, v2)

    # ---- fold eval-mode BN + conv bias into weights / a single per-channel shift ----
    sc1 = g1 / jnp.sqrt(v1 + EPS)
    t1 = be1 - m1 * sc1
    sc2 = g2 / jnp.sqrt(v2 + EPS)
    t2 = be2 - m2 * sc2
    # k=3 conv as one K=3C matmul: w1cat[co, k*C + ci] = w1[co, ci, k]
    w1cat = jnp.transpose(w1, (0, 2, 1)).reshape(C, 3 * C)
    w1_fold = (sc1[:, None] * w1cat).astype(MXU_DTYPE)
    sh1 = (sc1 * b1 + t1)[:, None].astype(jnp.float32)
    w2_fold = (sc2[:, None] * w2[:, :, 0]).astype(MXU_DTYPE)
    sh2 = (sc2 * b2 + t2)[:, None].astype(jnp.float32)

    kernel_params = (w1_fold, sh1, w2_fold, sh2)
    return kernel_params, module_params


def reference_forward(x_ncl, module_params):
    """Pure-JAX mirror of the PyTorch module (eval-mode BN), NCL layout.

    Conv operands are rounded to bf16 to match the kernel's MXU operand dtype
    (a no-op here because the test data is already bf16-representable)."""
    w1, b1, g1, be1, m1, v1, w2, b2, g2, be2, m2, v2 = module_params
    rb = lambda a: a.astype(jnp.bfloat16).astype(jnp.float32)
    dn = ('NCH', 'OIH', 'NCH')
    h = jax.lax.conv_general_dilated(rb(x_ncl), rb(w1), (1,), ((1, 1),),
                                     dimension_numbers=dn) + b1[None, :, None]
    h = (h - m1[None, :, None]) / jnp.sqrt(v1[None, :, None] + EPS) * g1[None, :, None] \
        + be1[None, :, None]
    h = jnp.maximum(h, 0.0)
    h = jax.lax.conv_general_dilated(rb(h), rb(w2), (1,), ((0, 0),),
                                     dimension_numbers=dn) + b2[None, :, None]
    h = (h - m2[None, :, None]) / jnp.sqrt(v2[None, :, None] + EPS) * g2[None, :, None] \
        + be2[None, :, None]
    h = jnp.maximum(h, 0.0)
    return h + x_ncl


if __name__ == "__main__":
    key = jax.random.PRNGKey(0)
    kx, kp = jax.random.split(key)
    N, L = 2, 16
    # bf16-representable test input so the f32 reference and the bf16-MXU kernel
    # see identical operand values (channel count C=64 is fixed by the module).
    x = jax.random.normal(kx, (N, C, L), jnp.float32)
    x = x.astype(jnp.bfloat16).astype(jnp.float32)          # (N, C, L), NCL layout

    kernel_params, module_params = make_params(kp)

    out = jax.block_until_ready(resblock_forward(x, kernel_params))
    ref = reference_forward(x, module_params)
    np.testing.assert_allclose(np.asarray(out), np.asarray(ref), rtol=5e-3, atol=5e-3)
    print("KERNEL_OK")
</pallas_src>

<mosaic_0001>
module attributes {stable_mosaic.version = 11 : i64} {
  func.func @resblock_kernel(%arg0: i32, %arg1: memref<1x64x16xf32, #tpu.memory_space<vmem>>, %arg2: memref<64x192xbf16, #tpu.memory_space<vmem>>, %arg3: memref<64x1xf32, #tpu.memory_space<vmem>>, %arg4: memref<64x64xbf16, #tpu.memory_space<vmem>>, %arg5: memref<64x1xf32, #tpu.memory_space<vmem>>, %arg6: memref<1x64x16xf32, #tpu.memory_space<vmem>>, %arg7: memref<64x18xf32, #tpu.memory_space<vmem>>) attributes {dimension_semantics = [#tpu.dimension_semantics<parallel>], iteration_bounds = array<i64: 2>, scalar_prefetch = 0 : i64, scratch_operands = 1 : i64, tpu.core_type = #tpu.core_type<tc>, window_params = [{transform_indices = @transform_0, window_bounds = array<i64: 1, 64, 16>}, {pipeline_mode = #tpu.pipeline_mode<synchronous>, transform_indices = @transform_1, window_bounds = array<i64: 64, 192>}, {pipeline_mode = #tpu.pipeline_mode<synchronous>, transform_indices = @transform_2, window_bounds = array<i64: 64, 1>}, {pipeline_mode = #tpu.pipeline_mode<synchronous>, transform_indices = @transform_3, window_bounds = array<i64: 64, 64>}, {pipeline_mode = #tpu.pipeline_mode<synchronous>, transform_indices = @transform_4, window_bounds = array<i64: 64, 1>}, {transform_indices = @transform_5, window_bounds = array<i64: 1, 64, 16>}]} {
    %c0 = arith.constant 0 : index
    %c0_0 = arith.constant 0 : index
    %c0_1 = arith.constant 0 : index
    %0 = vector.load %arg1[%c0, %c0_0, %c0_1] : memref<1x64x16xf32, #tpu.memory_space<vmem>>, vector<1x64x16xf32>
    %1 = vector.shape_cast %0 : vector<1x64x16xf32> to vector<64x16xf32>
    %cst = arith.constant 0.000000e+00 : f32
    %2 = vector.broadcast %cst : f32 to vector<64x1xf32>
    %c0_2 = arith.constant 0 : index
    %c0_3 = arith.constant 0 : index
    %3 = vector.load %arg7[%c0_2, %c0_3] : memref<64x18xf32, #tpu.memory_space<vmem>>, vector<64x1xf32>
    tpu.vector_store %arg7[%c0_2, %c0_3], %2 {strides = array<i32>} : memref<64x18xf32, #tpu.memory_space<vmem>>, vector<64x1xf32>,
    %cst_4 = arith.constant 0.000000e+00 : f32
    %4 = vector.broadcast %cst_4 : f32 to vector<64x1xf32>
    %c0_5 = arith.constant 0 : index
    %c17 = arith.constant 17 : index
    %5 = vector.load %arg7[%c0_5, %c17] : memref<64x18xf32, #tpu.memory_space<vmem>>, vector<64x1xf32>
    tpu.vector_store %arg7[%c0_5, %c17], %4 {strides = array<i32>} : memref<64x18xf32, #tpu.memory_space<vmem>>, vector<64x1xf32>,
    %c0_6 = arith.constant 0 : index
    %c1 = arith.constant 1 : index
    %6 = vector.load %arg7[%c0_6, %c1] : memref<64x18xf32, #tpu.memory_space<vmem>>, vector<64x16xf32>
    tpu.vector_store %arg7[%c0_6, %c1], %1 {strides = array<i32>} : memref<64x18xf32, #tpu.memory_space<vmem>>, vector<64x16xf32>,
    %c0_7 = arith.constant 0 : index
    %c0_8 = arith.constant 0 : index
    %7 = vector.load %arg7[%c0_7, %c0_8] : memref<64x18xf32, #tpu.memory_space<vmem>>, vector<64x16xf32>
    %c0_9 = arith.constant 0 : index
    %c1_10 = arith.constant 1 : index
    %8 = vector.load %arg7[%c0_9, %c1_10] : memref<64x18xf32, #tpu.memory_space<vmem>>, vector<64x16xf32>
    %c0_11 = arith.constant 0 : index
    %c2 = arith.constant 2 : index
    %9 = vector.load %arg7[%c0_11, %c2] : memref<64x18xf32, #tpu.memory_space<vmem>>, vector<64x16xf32>
    %10 = tpu.concatenate %7, %8, %9 in 0 : vector<64x16xf32>, vector<64x16xf32>, vector<64x16xf32> -> vector<192x16xf32>
    %11 = arith.truncf %10 : vector<192x16xf32> to vector<192x16xbf16>
    %c0_12 = arith.constant 0 : index
    %c0_13 = arith.constant 0 : index
    %12 = vector.load %arg2[%c0_12, %c0_13] : memref<64x192xbf16, #tpu.memory_space<vmem>>, vector<64x192xbf16>
    %cst_14 = arith.constant dense<0.000000e+00> : vector<64x16xf32>
    %13 = tpu.matmul %12, %11, %cst_14 {dimension_numbers = #tpu.dot_dimension_numbers<[1], [0], [0], [1], [0, 0, 1, 1], [], []>} : vector<64x192xbf16>, vector<192x16xbf16>, vector<64x16xf32> -> vector<64x16xf32>
    %c0_15 = arith.constant 0 : index
    %c0_16 = arith.constant 0 : index
    %14 = vector.load %arg3[%c0_15, %c0_16] : memref<64x1xf32, #tpu.memory_space<vmem>>, vector<64x1xf32>
    %15 = vector.broadcast %14 : vector<64x1xf32> to vector<64x16xf32>
    %16 = arith.addf %13, %15 : vector<64x16xf32>
    %cst_17 = arith.constant 0.000000e+00 : f32
    %17 = vector.broadcast %cst_17 : f32 to vector<64x16xf32>
    %18 = arith.maximumf %16, %17 : vector<64x16xf32>
    %c0_18 = arith.constant 0 : index
    %c0_19 = arith.constant 0 : index
    %19 = vector.load %arg4[%c0_18, %c0_19] : memref<64x64xbf16, #tpu.memory_space<vmem>>, vector<64x64xbf16>
    %20 = arith.truncf %18 : vector<64x16xf32> to vector<64x16xbf16>
    %cst_20 = arith.constant dense<0.000000e+00> : vector<64x16xf32>
    %21 = tpu.matmul %19, %20, %cst_20 {dimension_numbers = #tpu.dot_dimension_numbers<[1], [0], [0], [1], [0, 0, 1, 1], [], []>} : vector<64x64xbf16>, vector<64x16xbf16>, vector<64x16xf32> -> vector<64x16xf32>
    %c0_21 = arith.constant 0 : index
    %c0_22 = arith.constant 0 : index
    %22 = vector.load %arg5[%c0_21, %c0_22] : memref<64x1xf32, #tpu.memory_space<vmem>>, vector<64x1xf32>
    %23 = vector.broadcast %22 : vector<64x1xf32> to vector<64x16xf32>
    %24 = arith.addf %21, %23 : vector<64x16xf32>
    %cst_23 = arith.constant 0.000000e+00 : f32
    %25 = vector.broadcast %cst_23 : f32 to vector<64x16xf32>
    %26 = arith.maximumf %24, %25 : vector<64x16xf32>
    %27 = arith.addf %26, %1 : vector<64x16xf32>
    %c0_24 = arith.constant 0 : index
    %c0_25 = arith.constant 0 : index
    %c0_26 = arith.constant 0 : index
    %28 = vector.load %arg6[%c0_24, %c0_25, %c0_26] : memref<1x64x16xf32, #tpu.memory_space<vmem>>, vector<1x64x16xf32>
    %29 = vector.shape_cast %28 : vector<1x64x16xf32> to vector<64x16xf32>
    %30 = vector.shape_cast %27 : vector<64x16xf32> to vector<1x64x16xf32>
    tpu.vector_store %arg6[%c0_24, %c0_25, %c0_26], %30 {strides = array<i32>} : memref<1x64x16xf32, #tpu.memory_space<vmem>>, vector<1x64x16xf32>,
    return
  }
  func.func @transform_0(%arg0: i32) -> (i32, i32, i32) {
    %c0_i32 = arith.constant 0 : i32
    %c0_i32_0 = arith.constant 0 : i32
    %c0_i32_1 = arith.constant 0 : i32
    return %arg0, %c0_i32, %c0_i32_0 : i32, i32, i32
  }
  func.func @transform_1(%arg0: i32) -> (i32, i32) {
    %c0_i32 = arith.constant 0 : i32
    %c0_i32_0 = arith.constant 0 : i32
    %c0_i32_1 = arith.constant 0 : i32
    return %c0_i32, %c0_i32_0 : i32, i32
  }
  func.func @transform_2(%arg0: i32) -> (i32, i32) {
    %c0_i32 = arith.constant 0 : i32
    %c0_i32_0 = arith.constant 0 : i32
    %c0_i32_1 = arith.constant 0 : i32
    return %c0_i32, %c0_i32_0 : i32, i32
  }
  func.func @transform_3(%arg0: i32) -> (i32, i32) {
    %c0_i32 = arith.constant 0 : i32
    %c0_i32_0 = arith.constant 0 : i32
    %c0_i32_1 = arith.constant 0 : i32
    return %c0_i32, %c0_i32_0 : i32, i32
  }
  func.func @transform_4(%arg0: i32) -> (i32, i32) {
    %c0_i32 = arith.constant 0 : i32
    %c0_i32_0 = arith.constant 0 : i32
    %c0_i32_1 = arith.constant 0 : i32
    return %c0_i32, %c0_i32_0 : i32, i32
  }
  func.func @transform_5(%arg0: i32) -> (i32, i32, i32) {
    %c0_i32 = arith.constant 0 : i32
    %c0_i32_0 = arith.constant 0 : i32
    %c0_i32_1 = arith.constant 0 : i32
    return %arg0, %c0_i32, %c0_i32_0 : i32, i32, i32
  }
}

</mosaic_0001>

<llo_original>
// kernel: tpu_custom_call.1
$region0: #{tpu_custom_call.1}
  #allocation0 [shape = 'u32[]', space=smem, size = 0x4, offset = 0x4, fixed_abs, tag = 'smem constant byte address 0x4 - core index']
  #allocation1 [shape = 'u32[72,128]{1,0:T(1,128)}', space=vmem, size = 0x9000, scoped, tag = 'internal scratch']
  #allocation2 [shape = 'f32[64,18]{1,0:T(8,128)}', space=vmem, size = 0x8000, scoped, tag = 'scratch operand']
  %s0 = inlined_call_operand.vmem [shape: f32[2,64,16], index: 0, kind: input, shape index: {}]
  %s1 = inlined_call_operand.vmem [shape: bf16[64,192], index: 1, kind: input, shape index: {}]
  %s2 = inlined_call_operand.vmem [shape: f32[64,1], index: 2, kind: input, shape index: {}]
  %s3 = inlined_call_operand.vmem [shape: bf16[64,64], index: 3, kind: input, shape index: {}]
  %s4 = inlined_call_operand.vmem [shape: f32[64,1], index: 4, kind: input, shape index: {}]
  %s5 = inlined_call_operand.vmem [shape: f32[2,64,16], index: 5, kind: output, shape index: {}]
  %s6 = sld [smem:[#allocation0]]
  $region53: #{tpu_custom_call.1} parent=0
    _
  %s8 = ssub.s32 1, %s6
  %s9 = scalar_select 0, %s8, %s6
  loop: start=0, step=1, limit=4
  $region2: #{tpu_custom_call.1} parent=0 // loop_pre_header
    _
  $region3: #{tpu_custom_call.1} parent=0 // loop_header
    %s11 = sphi 0, %s15
    %p12 = scmp.ge.s32.totalorder %s11, 4
    %s21 = sphi 0, %s23
    %s24 = sphi 0, %s21
    %s25 = sphi 0, %s24
    %s41 = sphi 0, %s25
    %s45 = sphi 0, %s45
    %s47 = sphi 0, %s45
    %s48 = sphi 0, %s47
    %s62 = sphi 0, %s48
    %s66 = sphi 0, %s66
    %s68 = sphi 0, %s66
    %s69 = sphi 0, %s68
    %s83 = sphi 0, %s69
    %s87 = sphi 0, %s87
    %s89 = sphi 0, %s87
    %s90 = sphi 0, %s89
    %s104 = sphi 0, %s90
    %s108 = sphi 0, %s108
    %s110 = sphi 0, %s108
    %s111 = sphi 0, %s110
    %s125 = sphi 0, %s111
    %s131 = sphi 0, %s133
    %s134 = sphi 0, %s131
    %s135 = sphi 0, %s134
    %s151 = sphi 0, %s135
  $region4: #{tpu_custom_call.1} parent=0 // loop_header_branch
    %14 = sbr.rel (%p12) target = $region8
  $region5: #{tpu_custom_call.1} parent=0 // loop_body
    %s16 = ssub.s32 %s11, 1
    %s17 = ssub.s32 %s11, 2
    %s18 = sadd.s32 %s11, 1
    %s19 = ssub.s32 %s11, %s18
    %p20 = scmp.eq.s32.totalorder %s19, 0
    %s22 = sadd.s32 %s21, 1
    %s23 = scalar_select %p20, %s21, %s22
    %p26 = pneg %p20
    %p27 = scmp.eq.s32.totalorder %s11, 1
    %p28 = por %p26, %p27
    %p29 = scmp.ne.s32.totalorder %s21, %s24
    %p30 = scmp.eq.s32.totalorder %s11, 0
    %p31 = por %p29, %p30
    %p32 = scmp.ne.s32.totalorder %s21, %s24
    %p33 = scmp.eq.s32.totalorder %s16, 1
    %p34 = por %p32, %p33
    %p35 = scmp.ne.s32.totalorder %s24, %s25
    %p36 = scmp.eq.s32.totalorder %s16, 0
    %p37 = por %p35, %p36
    %p38 = scmp.ne.s32.totalorder %s24, %s25
    %p39 = scmp.eq.s32.totalorder %s17, 1
    %p40 = por %p38, %p39
    %p42 = scmp.ne.s32.totalorder %s25, %s41
    %p43 = scmp.eq.s32.totalorder %s17, 0
    %p44 = por %p42, %p43
    %s46 = sadd.s32 %s45, 1
    %p49 = scmp.eq.s32.totalorder %s11, 1
    %p50 = scmp.ne.s32.totalorder %s45, %s47
    %p51 = scmp.eq.s32.totalorder %s11, 0
    %p52 = por %p50, %p51
    %p53 = scmp.ne.s32.totalorder %s45, %s47
    %p54 = scmp.eq.s32.totalorder %s16, 1
    %p55 = por %p53, %p54
    %p56 = scmp.ne.s32.totalorder %s47, %s48
    %p57 = scmp.eq.s32.totalorder %s16, 0
    %p58 = por %p56, %p57
    %p59 = scmp.ne.s32.totalorder %s47, %s48
    %p60 = scmp.eq.s32.totalorder %s17, 1
    %p61 = por %p59, %p60
    %p63 = scmp.ne.s32.totalorder %s48, %s62
    %p64 = scmp.eq.s32.totalorder %s17, 0
    %p65 = por %p63, %p64
    %s67 = sadd.s32 %s66, 1
    %p70 = scmp.eq.s32.totalorder %s11, 1
    %p71 = scmp.ne.s32.totalorder %s66, %s68
    %p72 = scmp.eq.s32.totalorder %s11, 0
    %p73 = por %p71, %p72
    %p74 = scmp.ne.s32.totalorder %s66, %s68
    %p75 = scmp.eq.s32.totalorder %s16, 1
    %p76 = por %p74, %p75
    %p77 = scmp.ne.s32.totalorder %s68, %s69
    %p78 = scmp.eq.s32.totalorder %s16, 0
    %p79 = por %p77, %p78
    %p80 = scmp.ne.s32.totalorder %s68, %s69
    %p81 = scmp.eq.s32.totalorder %s17, 1
    %p82 = por %p80, %p81
    %p84 = scmp.ne.s32.totalorder %s69, %s83
    %p85 = scmp.eq.s32.totalorder %s17, 0
    %p86 = por %p84, %p85
    %s88 = sadd.s32 %s87, 1
    %p91 = scmp.eq.s32.totalorder %s11, 1
    %p92 = scmp.ne.s32.totalorder %s87, %s89
    %p93 = scmp.eq.s32.totalorder %s11, 0
    %p94 = por %p92, %p93
    %p95 = scmp.ne.s32.totalorder %s87, %s89
    %p96 = scmp.eq.s32.totalorder %s16, 1
    %p97 = por %p95, %p96
    %p98 = scmp.ne.s32.totalorder %s89, %s90
    %p99 = scmp.eq.s32.totalorder %s16, 0
    %p100 = por %p98, %p99
    %p101 = scmp.ne.s32.totalorder %s89, %s90
    %p102 = scmp.eq.s32.totalorder %s17, 1
    %p103 = por %p101, %p102
    %p105 = scmp.ne.s32.totalorder %s90, %s104
    %p106 = scmp.eq.s32.totalorder %s17, 0
    %p107 = por %p105, %p106
    %s109 = sadd.s32 %s108, 1
    %p112 = scmp.eq.s32.totalorder %s11, 1
    %p113 = scmp.ne.s32.totalorder %s108, %s110
    %p114 = scmp.eq.s32.totalorder %s11, 0
    %p115 = por %p113, %p114
    %p116 = scmp.ne.s32.totalorder %s108, %s110
    %p117 = scmp.eq.s32.totalorder %s16, 1
    %p118 = por %p116, %p117
    %p119 = scmp.ne.s32.totalorder %s110, %s111
    %p120 = scmp.eq.s32.totalorder %s16, 0
    %p121 = por %p119, %p120
    %p122 = scmp.ne.s32.totalorder %s110, %s111
    %p123 = scmp.eq.s32.totalorder %s17, 1
    %p124 = por %p122, %p123
    %p126 = scmp.ne.s32.totalorder %s111, %s125
    %p127 = scmp.eq.s32.totalorder %s17, 0
    %p128 = por %p126, %p127
    %s129 = ssub.s32 %s11, %s18
    %p130 = scmp.eq.s32.totalorder %s129, 0
    %s132 = sadd.s32 %s131, 1
    %s133 = scalar_select %p130, %s131, %s132
    %p136 = pneg %p130
    %p137 = scmp.eq.s32.totalorder %s11, 1
    %p138 = por %p136, %p137
    %p139 = scmp.ne.s32.totalorder %s131, %s134
    %p140 = scmp.eq.s32.totalorder %s11, 0
    %p141 = por %p139, %p140
    %p142 = scmp.ne.s32.totalorder %s131, %s134
    %p143 = scmp.eq.s32.totalorder %s16, 1
    %p144 = por %p142, %p143
    %p145 = scmp.ne.s32.totalorder %s134, %s135
    %p146 = scmp.eq.s32.totalorder %s16, 0
    %p147 = por %p145, %p146
    %p148 = scmp.ne.s32.totalorder %s134, %s135
    %p149 = scmp.eq.s32.totalorder %s17, 1
    %p150 = por %p148, %p149
    %p152 = scmp.ne.s32.totalorder %s135, %s151
    %p153 = scmp.eq.s32.totalorder %s17, 0
    %p154 = por %p152, %p153
    %p155 = scmp.le.s32.totalorder 1, %s11
    %p156 = scmp.lt.s32.totalorder %s11, 3
    %p157 = pnand %p155, %p156
    %p158 = pneg %p157
    // Predicated region
    $region9: #{tpu_custom_call.1} parent=5 // pred_check
      _
    $region10: #{tpu_custom_call.1} parent=5 // pred_check_branch
      %160 = sbr.rel (%p157) target = $region12
    $region11: #{tpu_custom_call.1} parent=5 // pred_region
      %s161 = ssub.s32 %s11, 1
      // Predicated region
      $region13: #{tpu_custom_call.1} parent=11 // pred_check
        %p162 = pneg %p58
      $region14: #{tpu_custom_call.1} parent=11 // pred_check_branch
        %164 = sbr.rel (%p162) target = $region16
      $region15: #{tpu_custom_call.1} parent=11 // pred_region
        _
      $region16: #{tpu_custom_call.1} parent=11 // pred_fallthru
        _
      // Predicated region
      $region17: #{tpu_custom_call.1} parent=11 // pred_check
        %p165 = pneg %p79
      $region18: #{tpu_custom_call.1} parent=11 // pred_check_branch
        %167 = sbr.rel (%p165) target = $region20
      $region19: #{tpu_custom_call.1} parent=11 // pred_region
        _
      $region20: #{tpu_custom_call.1} parent=11 // pred_fallthru
        _
      // Predicated region
      $region21: #{tpu_custom_call.1} parent=11 // pred_check
        %p168 = pneg %p100
      $region22: #{tpu_custom_call.1} parent=11 // pred_check_branch
        %170 = sbr.rel (%p168) target = $region24
      $region23: #{tpu_custom_call.1} parent=11 // pred_region
        _
      $region24: #{tpu_custom_call.1} parent=11 // pred_fallthru
        _
      // Predicated region
      $region25: #{tpu_custom_call.1} parent=11 // pred_check
        %p171 = pneg %p121
      $region26: #{tpu_custom_call.1} parent=11 // pred_check_branch
        %173 = sbr.rel (%p171) target = $region28
      $region27: #{tpu_custom_call.1} parent=11 // pred_region
        _
      $region28: #{tpu_custom_call.1} parent=11 // pred_fallthru
        _
    $region12: #{tpu_custom_call.1} parent=5 // pred_fallthru
      _
    %p174 = scmp.lt.s32.totalorder %s11, 2
    // Predicated region
    $region29: #{tpu_custom_call.1} parent=5 // pred_check
      %p175 = pneg %p174
    $region30: #{tpu_custom_call.1} parent=5 // pred_check_branch
      %177 = sbr.rel (%p175) target = $region32
    $region31: #{tpu_custom_call.1} parent=5 // pred_region
      // Predicated region
      $region33: #{tpu_custom_call.1} parent=31 // pred_check
        %p178 = pneg %p31
      $region34: #{tpu_custom_call.1} parent=31 // pred_check_branch
        %180 = sbr.rel (%p178) target = $region36
      $region35: #{tpu_custom_call.1} parent=31 // pred_region
        %p181 = scmp.lt.s32.totalorder %s11, 1
        %s182 = scalar_select %p181, %s11, 1
        %s183 = smul.addr %s182, 8
        %s184 = smul.addr %s183, 8
        %s185 = scalar_lea.vmem %s0, %s184
      $region36: #{tpu_custom_call.1} parent=31 // pred_fallthru
        _
    $region32: #{tpu_custom_call.1} parent=5 // pred_fallthru
      _
    %p186 = scmp.le.s32.totalorder 1, %s11
    %p187 = scmp.lt.s32.totalorder %s11, 3
    %p188 = pnand %p186, %p187
    %p189 = pneg %p188
    // Predicated region
    $region37: #{tpu_custom_call.1} parent=5 // pred_check
      _
    $region38: #{tpu_custom_call.1} parent=5 // pred_check_branch
      %191 = sbr.rel (%p188) target = $region40
    $region39: #{tpu_custom_call.1} parent=5 // pred_region
      %s192 = ssub.s32 %s11, 1
      %p193 = scmp.lt.s32.totalorder %s16, 1
      %s194 = scalar_select %p193, %s16, 1
      %s195 = smul.addr %s194, 8
      %s196 = smul.addr %s195, 8
      %s197 = scalar_lea.vmem %s0, %s196
      %p198 = pneg %p37
      %p199 = pneg %p34
      %p200 = pneg %p58
      %p201 = pneg %p55
      %p202 = pneg %p79
      %p203 = pneg %p76
      %p204 = pneg %p100
      %p205 = pneg %p97
      %p206 = pneg %p121
      %p207 = pneg %p118
      %p208 = pneg %p147
      %p209 = pneg %p144
      %p210 = scmp.lt.s32.totalorder %s16, 1
      %s211 = scalar_select %p210, %s16, 1
      %s212 = smul.addr %s211, 8
      %s213 = smul.addr %s212, 8
      %s214 = scalar_lea.vmem %s5, %s213
      %p215 = scmp.lt.s32.totalorder %s16, 1
      %s216 = scalar_select %p215, %s16, 1
      %s217 = smul.addr %s216, 8
      %s218 = smul.addr %s217, 8
      %s219 = scalar_lea.vmem %s0, %s218
      %p220 = scmp.lt.s32.totalorder %s16, 1
      %s221 = scalar_select %p220, %s16, 1
      %s222 = smul.addr %s221, 8
      %s223 = smul.addr %s222, 8
      %s224 = scalar_lea.vmem %s5, %s223
      %v226 = vld [vmem:[%s219] sm:$0xff]
      %v227 = vld [vmem:[%s219 + $0x8] sm:$0xff]
      %v228 = vld [vmem:[%s219 + $0x10] sm:$0xff]
      %v229 = vld [vmem:[%s219 + $0x18] sm:$0xff]
      %v230 = vld [vmem:[%s219 + $0x20] sm:$0xff]
      %v231 = vld [vmem:[%s219 + $0x28] sm:$0xff]
      %v232 = vld [vmem:[%s219 + $0x30] sm:$0xff]
      %v233 = vld [vmem:[%s219 + $0x38] sm:$0xff]
      %vm234 = vcmask 7168
      %235 = vst.msk [vmem:[#allocation2] sm:$0xff] %vm234, 0.0
      %236 = vst.msk [vmem:[#allocation2 + $0x8] sm:$0xff] %vm234, 0.0
      %237 = vst.msk [vmem:[#allocation2 + $0x10] sm:$0xff] %vm234, 0.0
      %238 = vst.msk [vmem:[#allocation2 + $0x18] sm:$0xff] %vm234, 0.0
      %239 = vst.msk [vmem:[#allocation2 + $0x20] sm:$0xff] %vm234, 0.0
      %240 = vst.msk [vmem:[#allocation2 + $0x28] sm:$0xff] %vm234, 0.0
      %241 = vst.msk [vmem:[#allocation2 + $0x30] sm:$0xff] %vm234, 0.0
      %242 = vst.msk [vmem:[#allocation2 + $0x38] sm:$0xff] %vm234, 0.0
      %vm243 = vcmask 146568
      %244 = vst.msk [vmem:[#allocation2] sm:$0xff] %vm243, 0.0
      %245 = vst.msk [vmem:[#allocation2 + $0x8] sm:$0xff] %vm243, 0.0
      %246 = vst.msk [vmem:[#allocation2 + $0x10] sm:$0xff] %vm243, 0.0
      %247 = vst.msk [vmem:[#allocation2 + $0x18] sm:$0xff] %vm243, 0.0
      %248 = vst.msk [vmem:[#allocation2 + $0x20] sm:$0xff] %vm243, 0.0
      %249 = vst.msk [vmem:[#allocation2 + $0x28] sm:$0xff] %vm243, 0.0
      %250 = vst.msk [vmem:[#allocation2 + $0x30] sm:$0xff] %vm243, 0.0
      %251 = vst.msk [vmem:[#allocation2 + $0x38] sm:$0xff] %vm243, 0.0
      %260 = vrot.lane.b32.xlu0 %v226, 1
      %v261 = vpop.permute.xlu0 %260
      %262 = vrot.lane.b32.xlu0 %v227, 1
      %v263 = vpop.permute.xlu0 %262
      %264 = vrot.lane.b32.xlu0 %v228, 1
      %v265 = vpop.permute.xlu0 %264
      %266 = vrot.lane.b32.xlu0 %v229, 1
      %v267 = vpop.permute.xlu0 %266
      %268 = vrot.lane.b32.xlu0 %v230, 1
      %v269 = vpop.permute.xlu0 %268
      %270 = vrot.lane.b32.xlu0 %v231, 1
      %v271 = vpop.permute.xlu0 %270
      %272 = vrot.lane.b32.xlu0 %v232, 1
      %v273 = vpop.permute.xlu0 %272
      %274 = vrot.lane.b32.xlu0 %v233, 1
      %v275 = vpop.permute.xlu0 %274
      %vm284 = vcmask 138248
      %285 = vst.msk [vmem:[#allocation2] sm:$0xff] %vm284, %v261
      %286 = vst.msk [vmem:[#allocation2 + $0x8] sm:$0xff] %vm284, %v263
      %287 = vst.msk [vmem:[#allocation2 + $0x10] sm:$0xff] %vm284, %v265
      %288 = vst.msk [vmem:[#allocation2 + $0x18] sm:$0xff] %vm284, %v267
      %289 = vst.msk [vmem:[#allocation2 + $0x20] sm:$0xff] %vm284, %v269
      %290 = vst.msk [vmem:[#allocation2 + $0x28] sm:$0xff] %vm284, %v271
      %291 = vst.msk [vmem:[#allocation2 + $0x30] sm:$0xff] %vm284, %v273
      %292 = vst.msk [vmem:[#allocation2 + $0x38] sm:$0xff] %vm284, %v275
      %v293 = vld [vmem:[#allocation2] sm:$0xff]
      %v294 = vld [vmem:[#allocation2 + $0x8] sm:$0xff]
      %v295 = vld [vmem:[#allocation2 + $0x10] sm:$0xff]
      %v296 = vld [vmem:[#allocation2 + $0x18] sm:$0xff]
      %v297 = vld [vmem:[#allocation2 + $0x20] sm:$0xff]
      %v298 = vld [vmem:[#allocation2 + $0x28] sm:$0xff]
      %v299 = vld [vmem:[#allocation2 + $0x30] sm:$0xff]
      %v300 = vld [vmem:[#allocation2 + $0x38] sm:$0xff]
      %309 = vrot.lane.b32.xlu0 %v293, 127
      %v310 = vpop.permute.xlu0 %309
      %311 = vrot.lane.b32.xlu0 %v294, 127
      %v312 = vpop.permute.xlu0 %311
      %313 = vrot.lane.b32.xlu0 %v295, 127
      %v314 = vpop.permute.xlu0 %313
      %315 = vrot.lane.b32.xlu0 %v296, 127
      %v316 = vpop.permute.xlu0 %315
      %317 = vrot.lane.b32.xlu0 %v297, 127
      %v318 = vpop.permute.xlu0 %317
      %319 = vrot.lane.b32.xlu0 %v298, 127
      %v320 = vpop.permute.xlu0 %319
      %321 = vrot.lane.b32.xlu0 %v299, 127
      %v322 = vpop.permute.xlu0 %321
      %323 = vrot.lane.b32.xlu0 %v300, 127
      %v324 = vpop.permute.xlu0 %323
      %333 = vrot.lane.b32.xlu0 %v293, 126
      %v334 = vpop.permute.xlu0 %333
      %335 = vrot.lane.b32.xlu0 %v294, 126
      %v336 = vpop.permute.xlu0 %335
      %337 = vrot.lane.b32.xlu0 %v295, 126
      %v338 = vpop.permute.xlu0 %337
      %339 = vrot.lane.b32.xlu0 %v296, 126
      %v340 = vpop.permute.xlu0 %339
      %341 = vrot.lane.b32.xlu0 %v297, 126
      %v342 = vpop.permute.xlu0 %341
      %343 = vrot.lane.b32.xlu0 %v298, 126
      %v344 = vpop.permute.xlu0 %343
      %345 = vrot.lane.b32.xlu0 %v299, 126
      %v346 = vpop.permute.xlu0 %345
      %347 = vrot.lane.b32.xlu0 %v300, 126
      %v348 = vpop.permute.xlu0 %347
      %v357 = vpack.c.bf16 %v294, %v293
      %v358 = vpack.c.bf16 %v296, %v295
      %v359 = vpack.c.bf16 %v298, %v297
      %v360 = vpack.c.bf16 %v300, %v299
      %v361 = vpack.c.bf16 %v312, %v310
      %v362 = vpack.c.bf16 %v316, %v314
      %v363 = vpack.c.bf16 %v320, %v318
      %v364 = vpack.c.bf16 %v324, %v322
      %v365 = vpack.c.bf16 %v336, %v334
      %v366 = vpack.c.bf16 %v340, %v338
      %v367 = vpack.c.bf16 %v344, %v342
      %v368 = vpack.c.bf16 %v348, %v346
      %v369 = vld [vmem:[%s1] sm:$0xff]
      %v370 = vld [vmem:[%s1 + $0x8] sm:$0xff]
      %v371 = vld [vmem:[%s1 + $0x10] sm:$0xff]
      %v372 = vld [vmem:[%s1 + $0x18] sm:$0xff]
      %v373 = vld [vmem:[%s1 + $0x20] sm:$0xff]
      %v374 = vld [vmem:[%s1 + $0x28] sm:$0xff]
      %v375 = vld [vmem:[%s1 + $0x30] sm:$0xff]
      %v376 = vld [vmem:[%s1 + $0x38] sm:$0xff]
      %v377 = vld [vmem:[%s2] sm:$0xff]
      %v378 = vld [vmem:[%s2 + $0x8] sm:$0xff]
      %v379 = vld [vmem:[%s2 + $0x10] sm:$0xff]
      %v380 = vld [vmem:[%s2 + $0x18] sm:$0xff]
      %v381 = vld [vmem:[%s2 + $0x20] sm:$0xff]
      %v382 = vld [vmem:[%s2 + $0x28] sm:$0xff]
      %v383 = vld [vmem:[%s2 + $0x30] sm:$0xff]
      %v384 = vld [vmem:[%s2 + $0x38] sm:$0xff]
      %386 = vset.pattern.permute.xlu0 0
      %387 = vperm.xlu0 %386, %v377
      %v388 = vpop.permute.xlu0 %387
      %391 = vset.pattern.permute.xlu0 0
      %392 = vperm.xlu0 %391, %v378
      %v393 = vpop.permute.xlu0 %392
      %396 = vset.pattern.permute.xlu0 0
      %397 = vperm.xlu0 %396, %v379
      %v398 = vpop.permute.xlu0 %397
      %401 = vset.pattern.permute.xlu0 0
      %402 = vperm.xlu0 %401, %v380
      %v403 = vpop.permute.xlu0 %402
      %406 = vset.pattern.permute.xlu0 0
      %407 = vperm.xlu0 %406, %v381
      %v408 = vpop.permute.xlu0 %407
      %411 = vset.pattern.permute.xlu0 0
      %412 = vperm.xlu0 %411, %v382
      %v413 = vpop.permute.xlu0 %412
      %416 = vset.pattern.permute.xlu0 0
      %417 = vperm.xlu0 %416, %v383
      %v418 = vpop.permute.xlu0 %417
      %421 = vset.pattern.permute.xlu0 0
      %422 = vperm.xlu0 %421, %v384
      %v423 = vpop.permute.xlu0 %422
      %v433 = vunpack.c.l.b16 %v369
      %v434 = vunpack.c.h.b16 %v369
      %v435 = vunpack.c.l.b16 %v370
      %v436 = vunpack.c.h.b16 %v370
      %v437 = vunpack.c.l.b16 %v371
      %v438 = vunpack.c.h.b16 %v371
      %v439 = vunpack.c.l.b16 %v372
      %v440 = vunpack.c.h.b16 %v372
      %v441 = vunpack.c.l.b16 %v373
      %v442 = vunpack.c.h.b16 %v373
      %v443 = vunpack.c.l.b16 %v374
      %v444 = vunpack.c.h.b16 %v374
      %v445 = vunpack.c.l.b16 %v375
      %v446 = vunpack.c.h.b16 %v375
      %v447 = vunpack.c.l.b16 %v376
      %v448 = vunpack.c.h.b16 %v376
      %v449 = vpack.c.b16 %v435, %v433
      %v450 = vpack.c.b16 %v436, %v434
      %v451 = vpack.c.b16 %v439, %v437
      %v452 = vpack.c.b16 %v440, %v438
      %v453 = vpack.c.b16 %v443, %v441
      %v454 = vpack.c.b16 %v444, %v442
      %v455 = vpack.c.b16 %v447, %v445
      %v456 = vpack.c.b16 %v448, %v446
      %vm461 = vcmask 523264
      %v463 = vsel %vm461, %v450, 0
      %v466 = vsel %vm461, %v452, 0
      %v469 = vsel %vm461, %v454, 0
      %v472 = vsel %vm461, %v456, 0
      %474 = vmatpush.bf16.msra.mxu0 %v364
      %475 = vmatpush.bf16.msra.mxu0 %v363
      %476 = vmatpush.bf16.msra.mxu0 %v362
      %477 = vmatpush.bf16.msra.mxu0 %v361
      %478 = vmatpush.bf16.msra.mxu0 %v360
      %479 = vmatpush.bf16.msra.mxu0 %v359
      %480 = vmatpush.bf16.msra.mxu0 %v358
      %481 = vmatpush.bf16.msra.mxu0 %v357
      %482 = vmatmul.bf16.gmra.mxu0 %v449
      %v483 = vpop.f32.mrf.mxu0
      %v484 = vadd.f32 %v388, %v483
      %v485 = vpop.f32.mrf.mxu0
      %v486 = vadd.f32 %v393, %v485
      %487 = vmatmul.bf16.gmra.mxu0 %v451
      %v488 = vpop.f32.mrf.mxu0
      %v489 = vadd.f32 %v398, %v488
      %v490 = vpop.f32.mrf.mxu0
      %v491 = vadd.f32 %v403, %v490
      %492 = vmatmul.bf16.gmra.mxu0 %v453
      %v493 = vpop.f32.mrf.mxu0
      %v494 = vadd.f32 %v408, %v493
      %v495 = vpop.f32.mrf.mxu0
      %v496 = vadd.f32 %v413, %v495
      %497 = vmatmul.bf16.gmra.mxu0 %v455
      %v498 = vpop.f32.mrf.mxu0
      %v499 = vadd.f32 %v418, %v498
      %v500 = vpop.f32.mrf.mxu0
      %v501 = vadd.f32 %v423, %v500
      %502 = vdwg.mxu0
      %503 = vmatpush.bf16.msra.mxu0 0
      %504 = vmatpush.bf16.msra.mxu0 0
      %505 = vmatpush.bf16.msra.mxu0 0
      %506 = vmatpush.bf16.msra.mxu0 0
      %507 = vmatpush.bf16.msra.mxu0 %v368
      %508 = vmatpush.bf16.msra.mxu0 %v367
      %509 = vmatpush.bf16.msra.mxu0 %v366
      %510 = vmatpush.bf16.msra.mxu0 %v365
      %511 = vmatmul.bf16.gmra.mxu0 %v463
      %v512 = vpop.f32.mrf.mxu0
      %v513 = vadd.f32 %v484, %v512
      %v514 = vpop.f32.mrf.mxu0
      %v515 = vadd.f32 %v486, %v514
      %516 = vmatmul.bf16.gmra.mxu0 %v466
      %v517 = vpop.f32.mrf.mxu0
      %v518 = vadd.f32 %v489, %v517
      %v519 = vpop.f32.mrf.mxu0
      %v520 = vadd.f32 %v491, %v519
      %521 = vmatmul.bf16.gmra.mxu0 %v469
      %v522 = vpop.f32.mrf.mxu0
      %v523 = vadd.f32 %v494, %v522
      %v524 = vpop.f32.mrf.mxu0
      %v525 = vadd.f32 %v496, %v524
      %526 = vmatmul.bf16.gmra.mxu0 %v472
      %v527 = vpop.f32.mrf.mxu0
      %v528 = vadd.f32 %v499, %v527
      %v529 = vpop.f32.mrf.mxu0
      %v530 = vadd.f32 %v501, %v529
      %531 = vdwg.mxu0
      %v532 = vmax.f32 %v513, 0.0
      %v533 = vmax.f32 %v515, 0.0
      %v534 = vmax.f32 %v518, 0.0
      %v535 = vmax.f32 %v520, 0.0
      %v536 = vmax.f32 %v523, 0.0
      %v537 = vmax.f32 %v525, 0.0
      %v538 = vmax.f32 %v528, 0.0
      %v539 = vmax.f32 %v530, 0.0
      %v540 = vld [vmem:[%s3] sm:$0xf]
      %v541 = vld [vmem:[%s3 + $0x4] sm:$0xf]
      %v542 = vld [vmem:[%s3 + $0x8] sm:$0xf]
      %v543 = vld [vmem:[%s3 + $0xc] sm:$0xf]
      %v544 = vld [vmem:[%s3 + $0x10] sm:$0xf]
      %v545 = vld [vmem:[%s3 + $0x14] sm:$0xf]
      %v546 = vld [vmem:[%s3 + $0x18] sm:$0xf]
      %v547 = vld [vmem:[%s3 + $0x1c] sm:$0xf]
      %v548 = vpack.c.bf16 %v533, %v532
      %v549 = vpack.c.bf16 %v535, %v534
      %v550 = vpack.c.bf16 %v537, %v536
      %v551 = vpack.c.bf16 %v539, %v538
      %v552 = vld [vmem:[%s4] sm:$0xff]
      %v553 = vld [vmem:[%s4 + $0x8] sm:$0xff]
      %v554 = vld [vmem:[%s4 + $0x10] sm:$0xff]
      %v555 = vld [vmem:[%s4 + $0x18] sm:$0xff]
      %v556 = vld [vmem:[%s4 + $0x20] sm:$0xff]
      %v557 = vld [vmem:[%s4 + $0x28] sm:$0xff]
      %v558 = vld [vmem:[%s4 + $0x30] sm:$0xff]
      %v559 = vld [vmem:[%s4 + $0x38] sm:$0xff]
      %561 = vset.pattern.permute.xlu0 0
      %562 = vperm.xlu0 %561, %v552
      %v563 = vpop.permute.xlu0 %562
      %566 = vset.pattern.permute.xlu0 0
      %567 = vperm.xlu0 %566, %v553
      %v568 = vpop.permute.xlu0 %567
      %571 = vset.pattern.permute.xlu0 0
      %572 = vperm.xlu0 %571, %v554
      %v573 = vpop.permute.xlu0 %572
      %576 = vset.pattern.permute.xlu0 0
      %577 = vperm.xlu0 %576, %v555
      %v578 = vpop.permute.xlu0 %577
      %581 = vset.pattern.permute.xlu0 0
      %582 = vperm.xlu0 %581, %v556
      %v583 = vpop.permute.xlu0 %582
      %586 = vset.pattern.permute.xlu0 0
      %587 = vperm.xlu0 %586, %v557
      %v588 = vpop.permute.xlu0 %587
      %591 = vset.pattern.permute.xlu0 0
      %592 = vperm.xlu0 %591, %v558
      %v593 = vpop.permute.xlu0 %592
      %596 = vset.pattern.permute.xlu0 0
      %597 = vperm.xlu0 %596, %v559
      %v598 = vpop.permute.xlu0 %597
      %v608 = vunpack.c.l.b16 %v540
      %v609 = vunpack.c.l.b16 %v541
      %v610 = vunpack.c.l.b16 %v542
      %v611 = vunpack.c.l.b16 %v543
      %v612 = vunpack.c.l.b16 %v544
      %v613 = vunpack.c.l.b16 %v545
      %v614 = vunpack.c.l.b16 %v546
      %v615 = vunpack.c.l.b16 %v547
      %v616 = vpack.c.b16 %v609, %v608
      %v617 = vpack.c.b16 %v611, %v610
      %v618 = vpack.c.b16 %v613, %v612
      %v619 = vpack.c.b16 %v615, %v614
      %v621 = vsel %vm461, %v616, 0
      %v624 = vsel %vm461, %v617, 0
      %v627 = vsel %vm461, %v618, 0
      %v630 = vsel %vm461, %v619, 0
      %632 = vmatpush.bf16.msra.mxu0 0
      %633 = vmatpush.bf16.msra.mxu0 0
      %634 = vmatpush.bf16.msra.mxu0 0
      %635 = vmatpush.bf16.msra.mxu0 0
      %636 = vmatpush.bf16.msra.mxu0 %v551
      %637 = vmatpush.bf16.msra.mxu0 %v550
      %638 = vmatpush.bf16.msra.mxu0 %v549
      %639 = vmatpush.bf16.msra.mxu0 %v548
      %640 = vmatmul.bf16.gmra.mxu0 %v621
      %v641 = vpop.f32.mrf.mxu0
      %v642 = vadd.f32 %v563, %v641
      %v643 = vpop.f32.mrf.mxu0
      %v644 = vadd.f32 %v568, %v643
      %645 = vmatmul.bf16.gmra.mxu0 %v624
      %v646 = vpop.f32.mrf.mxu0
      %v647 = vadd.f32 %v573, %v646
      %v648 = vpop.f32.mrf.mxu0
      %v649 = vadd.f32 %v578, %v648
      %650 = vmatmul.bf16.gmra.mxu0 %v627
      %v651 = vpop.f32.mrf.mxu0
      %v652 = vadd.f32 %v583, %v651
      %v653 = vpop.f32.mrf.mxu0
      %v654 = vadd.f32 %v588, %v653
      %655 = vmatmul.bf16.gmra.mxu0 %v630
      %v656 = vpop.f32.mrf.mxu0
      %v657 = vadd.f32 %v593, %v656
      %v658 = vpop.f32.mrf.mxu0
      %v659 = vadd.f32 %v598, %v658
      %660 = vdwg.mxu0
      %v661 = vmax.f32 %v642, 0.0
      %v662 = vmax.f32 %v644, 0.0
      %v663 = vmax.f32 %v647, 0.0
      %v664 = vmax.f32 %v649, 0.0
      %v665 = vmax.f32 %v652, 0.0
      %v666 = vmax.f32 %v654, 0.0
      %v667 = vmax.f32 %v657, 0.0
      %v668 = vmax.f32 %v659, 0.0
      %v669 = vadd.f32 %v661, %v226
      %v670 = vadd.f32 %v662, %v227
      %v671 = vadd.f32 %v663, %v228
      %v672 = vadd.f32 %v664, %v229
      %v673 = vadd.f32 %v665, %v230
      %v674 = vadd.f32 %v666, %v231
      %v675 = vadd.f32 %v667, %v232
      %v676 = vadd.f32 %v668, %v233
      %vm677 = vcmask 130048
      %678 = vst.msk [vmem:[%s224] sm:$0xff] %vm677, %v669
      %679 = vst.msk [vmem:[%s224 + $0x8] sm:$0xff] %vm677, %v670
      %680 = vst.msk [vmem:[%s224 + $0x10] sm:$0xff] %vm677, %v671
      %681 = vst.msk [vmem:[%s224 + $0x18] sm:$0xff] %vm677, %v672
      %682 = vst.msk [vmem:[%s224 + $0x20] sm:$0xff] %vm677, %v673
      %683 = vst.msk [vmem:[%s224 + $0x28] sm:$0xff] %vm677, %v674
      %684 = vst.msk [vmem:[%s224 + $0x30] sm:$0xff] %vm677, %v675
      %685 = vst.msk [vmem:[%s224 + $0x38] sm:$0xff] %vm677, %v676
      %p686 = scmp.lt.s32.totalorder %s16, 1
      %s687 = scalar_select %p686, %s16, 1
      %s688 = smul.addr %s687, 8
      %s689 = smul.addr %s688, 8
      %s690 = scalar_lea.vmem %s5, %s689
      // Predicated region
      $region41: #{tpu_custom_call.1} parent=39 // pred_check
        %p691 = pneg %p144
      $region42: #{tpu_custom_call.1} parent=39 // pred_check_branch
        %693 = sbr.rel (%p691) target = $region44
      $region43: #{tpu_custom_call.1} parent=39 // pred_region
        _
      $region44: #{tpu_custom_call.1} parent=39 // pred_fallthru
        _
    $region40: #{tpu_custom_call.1} parent=5 // pred_fallthru
      _
    %p694 = scmp.le.s32.totalorder 2, %s11
    // Predicated region
    $region45: #{tpu_custom_call.1} parent=5 // pred_check
      %p695 = pneg %p694
    $region46: #{tpu_custom_call.1} parent=5 // pred_check_branch
      %697 = sbr.rel (%p695) target = $region48
    $region47: #{tpu_custom_call.1} parent=5 // pred_region
      %s698 = ssub.s32 %s11, 2
      // Predicated region
      $region49: #{tpu_custom_call.1} parent=47 // pred_check
        %p699 = pneg %p150
      $region50: #{tpu_custom_call.1} parent=47 // pred_check_branch
        %701 = sbr.rel (%p699) target = $region52
      $region51: #{tpu_custom_call.1} parent=47 // pred_region
        %p702 = scmp.lt.s32.totalorder %s17, 1
        %s703 = scalar_select %p702, %s17, 1
        %s704 = smul.addr %s703, 8
        %s705 = smul.addr %s704, 8
        %s706 = scalar_lea.vmem %s5, %s705
      $region52: #{tpu_custom_call.1} parent=47 // pred_fallthru
        _
    $region48: #{tpu_custom_call.1} parent=5 // pred_fallthru
      _
  $region6: #{tpu_custom_call.1} parent=0 // loop_footer
    %s15 = sadd.s32 1, %s11
  $region7: #{tpu_custom_call.1} parent=0 // loop_footer_branch
    %10 = sbr.rel target = $region3
  $region8: #{tpu_custom_call.1} parent=0 // loop_exit
    _

</llo_original>
